<compile_context>
chip_gen: v7x
topology: tpu7x:2x2x1
jax: 0.10.0
libtpu: 0.0.40
codegen_flags: <defaults>
</compile_context>

<pallas_src>
import functools

import jax
import jax.numpy as jnp
from jax.experimental import pallas as pl
from jax.experimental.pallas import tpu as pltpu


def _rms_norm_kernel(x_ref, w_ref, o_ref, *, eps: float, fuse_in_f32: bool):
    # x_ref: (TR, H) tile in native dtype ; w_ref: (1, H) ; o_ref: (TR, H)
    x = x_ref[...]
    xf = x.astype(jnp.float32)
    # Per-row mean of squares accumulated in f32 (matches reference numerics).
    mean_sq = jnp.mean(xf * xf, axis=-1, keepdims=True)        # (TR, 1) f32
    inv_rms = jax.lax.rsqrt(mean_sq + eps)                     # (TR, 1) f32
    if fuse_in_f32:
        # f32 inputs, or v5e (no bf16 VPU): scale in f32, cast once at the end.
        y = xf * inv_rms * w_ref[...].astype(jnp.float32)
    else:
        # bf16/low-precision path on v6e/v7x: two native-dtype (TR, H)
        # multiplies instead of materializing a full (TR, H) f32 scale
        # broadcast (halves VALU work / vreg pressure on the big elementwise
        # path). Adds one extra low-precision rounding on inv_rms, well within
        # bf16 tolerance.
        y = (x * inv_rms.astype(x.dtype)) * w_ref[...].astype(x.dtype)
    o_ref[...] = y.astype(o_ref.dtype)


def _round_up(n: int, m: int) -> int:
    return -(-n // m) * m


def _chip_policy():
    """Returns (small_vmem, multi_tc, no_bf16_vpu) with conservative fallbacks."""
    vmem_bytes = 64 << 20          # conservative default (v7x-sized)
    kind = ""
    try:
        vmem_bytes = int(pltpu.get_tpu_info().vmem_capacity_bytes)
    except Exception:
        pass
    try:
        kind = jax.devices()[0].device_kind.lower()
    except Exception:
        pass
    is_v7 = ("v7" in kind) or ("tpu7" in kind) or ("7x" in kind)
    small_vmem = is_v7 or vmem_bytes <= (64 << 20)
    multi_tc = is_v7               # 2 TensorCores per chip on v7x
    no_bf16_vpu = "v5" in kind     # v5e VPU has no bf16 ALUs
    return small_vmem, multi_tc, no_bf16_vpu


def _pick_row_tile(rows: int, hidden: int, itemsize: int, *,
                   budget_bytes: int, min_steps: int) -> int:
    """Largest DMA-efficient row tile inside a byte budget / min-step count."""
    # Sublane pack factor: 8 rows per vreg for f32, 16 for bf16, 32 for int8.
    pack = 8 * max(1, 4 // itemsize)
    padded_rows = _round_up(rows, pack)
    row_bytes = max(1, hidden * itemsize)
    by_budget = max(pack, (budget_bytes // row_bytes) // pack * pack)
    tile = min(by_budget, padded_rows)
    # Only v7x asks for multiple steps (>=2 per TensorCore); single-TC chips
    # take the biggest tile the budget allows.
    if min_steps > 1 and padded_rows > pack:
        per_step = _round_up(-(-rows // min_steps), pack)
        tile = min(tile, max(pack, per_step))
    return max(pack, tile)


def tt_rms_norm(x: jax.Array, weight: jax.Array, eps: float = 1e-5,
                row_tile: int | None = None) -> jax.Array:
    """RMSNorm over the last axis of x, scaled by `weight`.

    `weight` may be the (hidden,) vector or the TT-module-style (32, hidden)
    row-expanded copy (all rows identical)."""
    orig_shape = x.shape
    hidden = orig_shape[-1]
    if weight.ndim == 2:            # TT TILE_LAYOUT artifact: rows are copies
        weight = weight[0]
    assert weight.shape == (hidden,)

    x2d = x.reshape(-1, hidden)                  # (rows, hidden)
    rows = x2d.shape[0]
    itemsize = jnp.dtype(x.dtype).itemsize

    small_vmem, multi_tc, no_bf16_vpu = _chip_policy()
    budget_bytes = (4 << 20) if small_vmem else (8 << 20)   # bytes of x per tile
    vmem_cap = (48 << 20) if small_vmem else (100 << 20)
    min_steps = 4 if multi_tc else 1

    if row_tile is None:
        row_tile = _pick_row_tile(rows, hidden, itemsize,
                                  budget_bytes=budget_bytes,
                                  min_steps=min_steps)
    w2d = weight.reshape(1, hidden)

    num_steps = -(-rows // row_tile)
    grid = (num_steps,)              # padded last block is safe: reduction is per-row

    fuse_in_f32 = (jnp.dtype(x.dtype) == jnp.float32) or no_bf16_vpu

    tile_bytes = row_tile * hidden * itemsize
    f32_tile_bytes = row_tile * hidden * 4

    # v7x only: a third input buffer helps hide DMA issue latency on short
    # streaming steps (budget permitting).
    in_bufs = 2
    if multi_tc and num_steps >= 3:
        need3 = 5 * tile_bytes + 2 * f32_tile_bytes + (4 << 20)
        if need3 <= vmem_cap:
            in_bufs = 3

    # in buffers + 2 out buffers + f32 temporaries (xf and the f32 product on
    # the fused-f32 path) + weight + slack.
    vmem_need = ((in_bufs + 2) * tile_bytes + 2 * f32_tile_bytes
                 + 4 * hidden * 4 + (4 << 20))
    vmem_limit = int(min(max(vmem_need, 32 << 20), vmem_cap))

    if in_bufs == 3:
        x_spec = pl.BlockSpec((row_tile, hidden), lambda i: (i, 0),
                              pipeline_mode=pl.Buffered(3))
    else:
        x_spec = pl.BlockSpec((row_tile, hidden), lambda i: (i, 0))

    out = pl.pallas_call(
        functools.partial(_rms_norm_kernel, eps=eps, fuse_in_f32=fuse_in_f32),
        out_shape=jax.ShapeDtypeStruct((rows, hidden), x.dtype),
        grid_spec=pltpu.PrefetchScalarGridSpec(
            num_scalar_prefetch=0,
            grid=grid,
            in_specs=[
                x_spec,
                # Constant block index: weight stays VMEM-resident for the
                # whole grid instead of being re-DMA'd each step.
                pl.BlockSpec((1, hidden), lambda i: (0, 0)),
            ],
            out_specs=pl.BlockSpec((row_tile, hidden), lambda i: (i, 0)),
        ),
        compiler_params=pltpu.CompilerParams(
            dimension_semantics=("parallel",),
            vmem_limit_bytes=vmem_limit),
    )(x2d, w2d)

    return out.reshape(orig_shape)


def _reference(x, weight, eps):
    if weight.ndim == 2:
        weight = weight[0]
    xf = x.astype(jnp.float32)
    inv = jax.lax.rsqrt(jnp.mean(xf * xf, axis=-1, keepdims=True) + eps)
    return (xf * inv * weight.astype(jnp.float32)).astype(x.dtype)


if __name__ == "__main__":
    key = jax.random.PRNGKey(0)
    kx, kw, kx2, kw2 = jax.random.split(key, 4)
    eps = 1e-5

    # Main case (matches module usage: bf16 activations, TT-style (32, hidden)
    # row-expanded bf16 weight).
    batch, seq, hidden = 2, 8, 256
    x = jax.random.normal(kx, (batch, seq, hidden),
                          dtype=jnp.float32).astype(jnp.bfloat16)
    w_vec = (1.0 + 0.01 * jax.random.normal(kw, (hidden,),
                                            dtype=jnp.float32)).astype(jnp.bfloat16)
    weight = jnp.broadcast_to(w_vec, (32, hidden))

    y = tt_rms_norm(x, weight, eps=eps)
    jax.block_until_ready(y)
    y_ref = _reference(x, weight, eps)
    err = jnp.max(jnp.abs(y.astype(jnp.float32) - y_ref.astype(jnp.float32)))
    assert err < 5e-2, f"max abs err too large (bf16 case): {err}"

    # Ragged-row f32 case: exercises the padded last grid block / f32 path.
    b2, s2, h2 = 3, 7, 128
    x2 = jax.random.normal(kx2, (b2, s2, h2), dtype=jnp.float32)
    w2 = 1.0 + 0.01 * jax.random.normal(kw2, (h2,), dtype=jnp.float32)
    y2 = tt_rms_norm(x2, w2, eps=eps)
    jax.block_until_ready(y2)
    err2 = jnp.max(jnp.abs(y2 - _reference(x2, w2, eps)))
    assert err2 < 1e-5, f"max abs err too large (f32 ragged case): {err2}"

    print("KERNEL_OK")
</pallas_src>

<mosaic_0001>
module attributes {stable_mosaic.version = 11 : i64} {
  func.func @_rms_norm_kernel(%arg0: i32, %arg1: memref<16x256xbf16, #tpu.memory_space<vmem>>, %arg2: memref<1x256xbf16, #tpu.memory_space<vmem>>, %arg3: memref<16x256xbf16, #tpu.memory_space<vmem>>) attributes {dimension_semantics = [#tpu.dimension_semantics<parallel>], iteration_bounds = array<i64: 1>, scalar_prefetch = 0 : i64, scratch_operands = 0 : i64, tpu.core_type = #tpu.core_type<tc>, window_params = [{transform_indices = @transform_0, window_bounds = array<i64: 16, 256>}, {pipeline_mode = #tpu.pipeline_mode<synchronous>, transform_indices = @transform_1, window_bounds = array<i64: 1, 256>}, {transform_indices = @transform_2, window_bounds = array<i64: 16, 256>}]} {
    %c0 = arith.constant 0 : index
    %c0_0 = arith.constant 0 : index
    %0 = vector.load %arg1[%c0, %c0_0] : memref<16x256xbf16, #tpu.memory_space<vmem>>, vector<16x256xbf16>
    %1 = arith.extf %0 : vector<16x256xbf16> to vector<16x256xf32>
    %2 = arith.mulf %1, %1 : vector<16x256xf32>
    %cst = arith.constant dense<0.000000e+00> : vector<16xf32>
    %3 = vector.multi_reduction <add>, %2, %cst [1] : vector<16x256xf32> to vector<16xf32>
    %4 = vector.shape_cast %3 : vector<16xf32> to vector<16x1xf32>
    %cst_1 = arith.constant 2.560000e+02 : f32
    %5 = vector.broadcast %cst_1 : f32 to vector<16x1xf32>
    %6 = arith.divf %4, %5 : vector<16x1xf32>
    %cst_2 = arith.constant 9.99999974E-6 : f32
    %7 = vector.broadcast %cst_2 : f32 to vector<16x1xf32>
    %8 = arith.addf %6, %7 : vector<16x1xf32>
    %9 = math.rsqrt %8 : vector<16x1xf32>
    %10 = arith.truncf %9 : vector<16x1xf32> to vector<16x1xbf16>
    %11 = vector.broadcast %10 : vector<16x1xbf16> to vector<16x256xbf16>
    %12 = arith.mulf %0, %11 : vector<16x256xbf16>
    %c0_3 = arith.constant 0 : index
    %c0_4 = arith.constant 0 : index
    %13 = vector.load %arg2[%c0_3, %c0_4] : memref<1x256xbf16, #tpu.memory_space<vmem>>, vector<1x256xbf16>
    %14 = vector.broadcast %13 : vector<1x256xbf16> to vector<16x256xbf16>
    %15 = arith.mulf %12, %14 : vector<16x256xbf16>
    %c0_5 = arith.constant 0 : index
    %c0_6 = arith.constant 0 : index
    %16 = vector.load %arg3[%c0_5, %c0_6] : memref<16x256xbf16, #tpu.memory_space<vmem>>, vector<16x256xbf16>
    tpu.vector_store %arg3[%c0_5, %c0_6], %15 {strides = array<i32>} : memref<16x256xbf16, #tpu.memory_space<vmem>>, vector<16x256xbf16>,
    return
  }
  func.func @transform_0(%arg0: i32) -> (i32, i32) {
    %c0_i32 = arith.constant 0 : i32
    %c0_i32_0 = arith.constant 0 : i32
    return %arg0, %c0_i32 : i32, i32
  }
  func.func @transform_1(%arg0: i32) -> (i32, i32) {
    %c0_i32 = arith.constant 0 : i32
    %c0_i32_0 = arith.constant 0 : i32
    %c0_i32_1 = arith.constant 0 : i32
    return %c0_i32, %c0_i32_0 : i32, i32
  }
  func.func @transform_2(%arg0: i32) -> (i32, i32) {
    %c0_i32 = arith.constant 0 : i32
    %c0_i32_0 = arith.constant 0 : i32
    return %arg0, %c0_i32 : i32, i32
  }
}

</mosaic_0001>

<llo_original>
// kernel: tpu_custom_call.1
$region0: #{tpu_custom_call.1}
  #allocation0 [shape = 'u32[]', space=smem, size = 0x4, offset = 0x4, fixed_abs, tag = 'smem constant byte address 0x4 - core index']
  #allocation1 [shape = 'u32[144,128]{1,0:T(1,128)}', space=vmem, size = 0x12000, scoped, tag = 'internal scratch']
  %s0 = inlined_call_operand.hbm [shape: bf16[16,256], index: 0, kind: input, shape index: {}]
  %s1 = inlined_call_operand.vmem [shape: bf16[1,256], index: 1, kind: input, shape index: {}]
  %s2 = inlined_call_operand.hbm [shape: bf16[16,256], index: 2, kind: output, shape index: {}]
  %s3 = sld [smem:[#allocation0]]
  $region22: #{tpu_custom_call.1} parent=0
    _
  %s5 = ssub.s32 1, %s3
  %s6 = scalar_select 0, %s5, %s3
  $region1: #{tpu_custom_call.1} parent=0
    #allocation2 [shape = 'u8[8192]{0}', space=vmem, size = 0x2000, scoped, tag = 'input window, operand 0, single buffered']
    #allocation3 [shape = 's32[1]{0}', space=sflag, size = 0x4, scoped, tag = 'scoped memory for tpu_custom_call.1']
    #allocation4 [shape = 's32[1]{0}', space=sflag, size = 0x4, scoped, tag = 'scoped memory for tpu_custom_call.1']
    #allocation5 [shape = 'u8[8192]{0}', space=vmem, size = 0x2000, scoped, tag = 'output window, operand 0, single buffered']
    %7 = vsyncpa [#allocation3], 0
    %8 = vsyncpa [#allocation4], 0
    // Predicated region
    $region2: #{tpu_custom_call.1} parent=1 // pred_check
      _
    $region3: #{tpu_custom_call.1} parent=1 // pred_check_branch
      %10 = sbr.rel (0) target = $region5
    $region4: #{tpu_custom_call.1} parent=1 // pred_region
      %s12 = ssub.s32 256, 256
      %13 = vsyncadd [#allocation3], %s12
      %s14 = sshll.u32 [#allocation2], 4
      %s15 = int_to_ptr.vmem [resolvable:$true] %s14
      %20 = dma.hbm_to_vmem [thread:$0]  %s0, 256, %s15, [#allocation3], 128, 128, 8
    $region5: #{tpu_custom_call.1} parent=1 // pred_fallthru
      _
    // Predicated region
    $region6: #{tpu_custom_call.1} parent=1 // pred_check
      _
    $region7: #{tpu_custom_call.1} parent=1 // pred_check_branch
      %22 = sbr.rel (0) target = $region9
    $region8: #{tpu_custom_call.1} parent=1 // pred_region
      _
    $region9: #{tpu_custom_call.1} parent=1 // pred_fallthru
      _
    // Predicated region
    $region10: #{tpu_custom_call.1} parent=1 // pred_check
      _
    $region11: #{tpu_custom_call.1} parent=1 // pred_check_branch
      %24 = sbr.rel (0) target = $region13
    $region12: #{tpu_custom_call.1} parent=1 // pred_region
      %25 = dma.done [#allocation3], 256
    $region13: #{tpu_custom_call.1} parent=1 // pred_fallthru
      _
    %v26 = vld [vmem:[#allocation2] sm:$0xff]
    %v27 = vld [vmem:[#allocation2 + $0x8] sm:$0xff]
    %v28 = vunpack.c.l.bf16 %v26
    %v29 = vunpack.c.h.bf16 %v26
    %v30 = vunpack.c.l.bf16 %v27
    %v31 = vunpack.c.h.bf16 %v27
    %v32 = vmul.f32 %v28, %v28
    %v33 = vmul.f32 %v29, %v29
    %v34 = vmul.f32 %v30, %v30
    %v35 = vmul.f32 %v31, %v31
    %v36 = vadd.f32 %v32, %v33
    %37 = vadd.xlane.f32.xlu0 %v36
    %v38 = vpop.xlane.xlu0 %37
    %v39 = vadd.f32 %v34, %v35
    %40 = vadd.xlane.f32.xlu0 %v39
    %v41 = vpop.xlane.xlu0 %40
    %v42 = vrcp.pop 256.0
    %v43 = vmul.f32 %v38, %v42
    %v44 = vmul.f32 %v41, %v42
    %v45 = vadd.f32 %v43, 1e-05
    %v46 = vadd.f32 %v44, 1e-05
    %v47 = vrsqrt.pop %v45
    %v48 = vrsqrt.pop %v46
    %v49 = vpack.c.bf16 %v48, %v47
    %v52 = vunpack.c.l.s4 839922192
    %v53 = vunpack.c.0.s8 %v52
    %v54 = vlaneseq
    %v55 = vshrl.u32 %v54, 7
    %v56 = vsub.s32 %v53, %v55
    %v57 = vrot.slane %v49, %v56
    %v59 = vunpack.c.l.s4 1985246804
    %v60 = vunpack.c.0.s8 %v59
    %v61 = vlaneseq
    %v62 = vshrl.u32 %v61, 7
    %v63 = vsub.s32 %v60, %v62
    %v64 = vrot.slane %v49, %v63
    %v67 = vmul.bf16 %v26, %v57
    %v68 = vmul.bf16 %v27, %v64
    %v69 = vld [vmem:[%s1] sm:$0x3]
    %v72 = vunpack.c.l.s4 1966171168
    %v73 = vunpack.c.0.s8 %v72
    %v74 = vlaneseq
    %v75 = vshrl.u32 %v74, 7
    %v76 = vsub.s32 %v73, %v75
    %v77 = vrot.slane %v69, %v76
    %v78 = vcombine.high %v77, %v77
    %v80 = vunpack.c.l.s4 1966171168
    %v81 = vunpack.c.0.s8 %v80
    %v82 = vlaneseq
    %v83 = vshrl.u32 %v82, 7
    %v84 = vsub.s32 %v81, %v83
    %v85 = vrot.slane %v77, %v84
    %v87 = vunpack.c.l.s4 1966171168
    %v88 = vunpack.c.0.s8 %v87
    %v89 = vlaneseq
    %v90 = vshrl.u32 %v89, 7
    %v91 = vsub.s32 %v88, %v90
    %v92 = vrot.slane %v78, %v91
    %v94 = vpack.i.b16 %v85, %v85
    %v96 = vlaneseq
    %v97 = vshrl.u32 %v96, 7
    %v98 = vsub.s32 0, %v97
    %v99 = vrot.slane %v94, %v98
    %v101 = vpack.i.b16 %v92, %v92
    %v103 = vlaneseq
    %v104 = vshrl.u32 %v103, 7
    %v105 = vsub.s32 0, %v104
    %v106 = vrot.slane %v101, %v105
    %v109 = vunpack.c.l.b16 %v99
    %v110 = vunpack.c.l.b16 %v106
    %v111 = vpack.c.b16 %v110, %v109
    %v113 = vmul.bf16 %v67, %v111
    %v114 = vmul.bf16 %v68, %v111
    %115 = vst [vmem:[#allocation5] sm:$0xff] %v113
    %116 = vst [vmem:[#allocation5 + $0x8] sm:$0xff] %v114
    // Predicated region
    $region14: #{tpu_custom_call.1} parent=1 // pred_check
      _
    $region15: #{tpu_custom_call.1} parent=1 // pred_check_branch
      %118 = sbr.rel (0) target = $region17
    $region16: #{tpu_custom_call.1} parent=1 // pred_region
      %s120 = ssub.s32 256, 256
      %121 = vsyncadd [#allocation4], %s120
      %s122 = sshll.u32 [#allocation5], 4
      %s123 = int_to_ptr.vmem [resolvable:$true] %s122
      %128 = dma.vmem_to_hbm [thread:$0]  %s123, 256, %s2, [#allocation4], 128, 128, 8
    $region17: #{tpu_custom_call.1} parent=1 // pred_fallthru
      _
    // Predicated region
    $region18: #{tpu_custom_call.1} parent=1 // pred_check
      _
    $region19: #{tpu_custom_call.1} parent=1 // pred_check_branch
      %130 = sbr.rel (0) target = $region21
    $region20: #{tpu_custom_call.1} parent=1 // pred_region
      %131 = dma.done [#allocation4], 256
    $region21: #{tpu_custom_call.1} parent=1 // pred_fallthru
      _
    %132 = vsyncpa [#allocation3], 1
    %133 = vsyncpa [#allocation4], 1

</llo_original>
